<compile_context>
chip_gen: v6e
topology: v6e:2x2x1
jax: 0.10.0
libtpu: 0.0.40
codegen_flags: <defaults>
</compile_context>

<pallas_src>
import functools

import jax
import jax.numpy as jnp
import numpy as np
from jax import lax
from jax.experimental import pallas as pl
from jax.experimental.pallas import tpu as pltpu

_LANE = 128


def _make_freqs(max_logscale, n_freqs, logscale=True):
    if logscale:
        freqs = 2.0 ** np.linspace(0.0, float(max_logscale), n_freqs)
    else:
        freqs = np.linspace(1.0, 2.0 ** float(max_logscale), n_freqs)
    return np.asarray(freqs, dtype=np.float64)


def _round_up(x, m):
    return ((x + m - 1) // m) * m


def _choose_tile(B_pad, block_b):
    """Largest 128-multiple divisor of B_pad that is <= block_b; prefer >=2 blocks."""
    cap = min(block_b, B_pad)
    cap = max(_LANE, cap - cap % _LANE)
    tb = cap
    while B_pad % tb:
        tb -= _LANE
    if B_pad // tb < 2 and B_pad >= 2 * _LANE:
        # Prefer at least 2 grid steps so the parallel grid axis can shard
        # across v7x's two TensorCores.
        t = min(cap, B_pad // 2)
        t -= t % _LANE
        while t >= _LANE and B_pad % t:
            t -= _LANE
        if t >= _LANE:
            tb = t
    return tb


def interleave_permutation(n_freqs, n_coord=3):
    """perm s.t. grouped_rows[perm] == PyTorch interleaved feature order."""
    S = n_coord * n_freqs
    perm = list(range(n_coord))
    for k in range(n_freqs):
        perm += [n_coord + n_coord * k + j for j in range(n_coord)]        # sin(f_k * x)
        perm += [n_coord + S + n_coord * k + j for j in range(n_coord)]    # cos(f_k * x)
    return np.asarray(perm, dtype=np.int32)


def _pos_embed_kernel(freq_ref, x_ref, out_ref, *, n_coord, n_freqs, chunk):
    # freq_ref: (n_coord*n_freqs, 1) f32   -- row r = freq for r // n_coord
    # x_ref:    (n_coord, tb)              -- batch along lanes (lane-dense)
    # out_ref:  (n_coord*(1+2*n_freqs), tb), GROUPED rows: [x | sin-all | cos-all]
    n_sc = n_coord * n_freqs
    tb = x_ref.shape[1]
    n_chunks = tb // chunk

    # Hoisted once per grid step (JAX does not CSE broadcast_in_dim).
    freq_b = jnp.broadcast_to(freq_ref[...].astype(jnp.float32), (n_sc, chunk))

    def body(i, carry):
        off = pl.multiple_of(i * chunk, chunk)
        sl = pl.ds(off, chunk)
        x = x_ref[:, sl]                                         # (3, chunk)
        out_ref[0:n_coord, sl] = x.astype(out_ref.dtype)
        # Dense (30, chunk) block: sublane-tile x over frequencies, one mul,
        # one sin, one cos (f32 arithmetic — v5e has no bf16 VALU/EUP).
        xt = jnp.concatenate([x.astype(jnp.float32)] * n_freqs, axis=0)
        xf = xt * freq_b
        out_ref[n_coord:n_coord + n_sc, sl] = jnp.sin(xf).astype(out_ref.dtype)
        out_ref[n_coord + n_sc:n_coord + 2 * n_sc, sl] = (
            jnp.cos(xf).astype(out_ref.dtype))
        return carry

    lax.fori_loop(0, n_chunks, body, 0)


def pos_embedding_t(xt, max_logscale=9, n_freqs=10, logscale=True, *,
                    block_b=8192, chunk=256, out_dtype=None):
    """Feature-major (batch-on-lanes) entry point.

    xt: (3, B_pad) with B_pad a multiple of 128.
    Returns (3 + 6*n_freqs, B_pad) in GROUPED row order:
        rows [0:3]            = x
        rows [3:3+3*n_freqs]  = sin(f_k * x_j)   at row 3 + 3*k + j
        rows [3+3*n_freqs:]   = cos(f_k * x_j)   at row 3 + 3*n_freqs + 3*k + j
    MLP consumers should fold interleave_permutation() into their first-layer
    weights instead of gathering (keeps the HBM savings).
    """
    D, B_pad = xt.shape
    if B_pad % _LANE != 0:
        raise ValueError("pad the batch axis to a multiple of 128")
    out_dtype = xt.dtype if out_dtype is None else out_dtype
    freqs = _make_freqs(max_logscale, n_freqs, logscale)
    n_sc = D * n_freqs
    out_dim = D + 2 * n_sc

    tb = _choose_tile(B_pad, block_b)
    n_blocks = B_pad // tb
    ck = min(chunk, tb)
    while tb % ck:
        ck //= 2

    freq_col = jnp.asarray(np.repeat(freqs, D).reshape(n_sc, 1), dtype=jnp.float32)

    kernel = functools.partial(_pos_embed_kernel, n_coord=D, n_freqs=n_freqs,
                               chunk=ck)

    cost = pl.CostEstimate(
        flops=2 * n_sc * B_pad,
        transcendentals=2 * n_sc * B_pad,
        bytes_accessed=(D * B_pad * xt.dtype.itemsize
                        + out_dim * B_pad * jnp.dtype(out_dtype).itemsize),
    )

    return pl.pallas_call(
        kernel,
        out_shape=jax.ShapeDtypeStruct((out_dim, B_pad), out_dtype),
        grid_spec=pltpu.PrefetchScalarGridSpec(
            num_scalar_prefetch=0,
            grid=(n_blocks,),
            in_specs=[
                pl.BlockSpec((n_sc, 1), lambda i: (0, 0)),     # freq column
                pl.BlockSpec((D, tb), lambda i: (0, i)),       # x^T tile
            ],
            out_specs=pl.BlockSpec((out_dim, tb), lambda i: (0, i)),
        ),
        compiler_params=pltpu.CompilerParams(
            dimension_semantics=("parallel",),
        ),
        cost_estimate=cost,
    )(freq_col, xt)


def pos_embedding(x, max_logscale=9, n_freqs=10, logscale=True, *,
                  block_b=8192, out_dtype=None):
    """PyTorch-semantics wrapper: x (B, 3) -> (B, 3 + 6*n_freqs), interleaved
    [x, sin(f0 x), cos(f0 x), sin(f1 x), cos(f1 x), ...]."""
    B, D = x.shape
    assert D == 3, "PosEmbedding expects last dim 3"

    # Pick a big lane tile and pad B so the tile divides exactly (no 128-lane
    # fallback cliff); prefer >=2 grid steps for v7x megacore.
    B128 = _round_up(max(B, 1), _LANE)
    n_blocks = -(-B128 // block_b)
    if B128 >= 2 * _LANE:
        n_blocks = max(n_blocks, 2)
    tb = _round_up(-(-B128 // n_blocks), _LANE)
    B_pad = n_blocks * tb

    xt = jnp.transpose(x)                              # (3, B)
    if B_pad != B:
        xt = jnp.pad(xt, ((0, 0), (0, B_pad - B)))     # (3, B_pad)

    out_t = pos_embedding_t(xt, max_logscale, n_freqs, logscale,
                            block_b=tb, out_dtype=out_dtype)   # grouped rows

    # Un-group and transpose in one relayout pass (the transpose was already
    # required for PyTorch layout; feature-major consumers should skip this
    # wrapper entirely and call pos_embedding_t).
    head = jnp.transpose(out_t[:D])                                  # (B_pad, 3)
    tail = out_t[D:].reshape(2, n_freqs, D, B_pad)                   # (t, k, j, b)
    tail = jnp.transpose(tail, (3, 1, 0, 2)).reshape(B_pad, 2 * D * n_freqs)
    out = jnp.concatenate([head, tail], axis=-1)
    if B_pad != B:
        out = out[:B]
    return out


def pos_embedding_ref(x, max_logscale=9, n_freqs=10, logscale=True):
    """Pure-JAX reference mirroring the PyTorch forward."""
    freqs = _make_freqs(max_logscale, n_freqs, logscale)
    out = [x]
    for f in freqs:
        fv = jnp.asarray(float(f), dtype=x.dtype)
        out.append(jnp.sin(fv * x))
        out.append(jnp.cos(fv * x))
    return jnp.concatenate(out, axis=-1)


if __name__ == "__main__":
    key = jax.random.PRNGKey(0)

    # Default NeRF config: max_logscale=9, n_freqs=10 -> out dim 63.
    B = 128
    x = jax.random.normal(key, (B, 3), dtype=jnp.float32)
    out = jax.block_until_ready(pos_embedding(x))
    ref = pos_embedding_ref(x)
    assert out.shape == (B, 3 + 6 * 10), out.shape
    np.testing.assert_allclose(np.asarray(out), np.asarray(ref),
                               rtol=1e-5, atol=1e-5)

    # Ragged batch exercises the wrapper-side padding path.
    B2 = 77
    x2 = x[:B2]
    out2 = jax.block_until_ready(pos_embedding(x2))
    ref2 = pos_embedding_ref(x2)
    assert out2.shape == (B2, 63), out2.shape
    np.testing.assert_allclose(np.asarray(out2), np.asarray(ref2),
                               rtol=1e-5, atol=1e-5)

    # Non-default config: linear frequency schedule.
    out3 = jax.block_until_ready(
        pos_embedding(x2, max_logscale=3, n_freqs=4, logscale=False))
    ref3 = pos_embedding_ref(x2, max_logscale=3, n_freqs=4, logscale=False)
    assert out3.shape == (B2, 3 + 6 * 4), out3.shape
    np.testing.assert_allclose(np.asarray(out3), np.asarray(ref3),
                               rtol=1e-5, atol=1e-5)

    # Feature-major entry point, multi-block grid and multi-chunk inner loop.
    B4 = 512
    x4t = jax.random.normal(jax.random.PRNGKey(1), (3, B4), dtype=jnp.float32)
    out4_t = jax.block_until_ready(pos_embedding_t(x4t, block_b=256, chunk=128))
    perm = interleave_permutation(10, 3)
    ref4 = pos_embedding_ref(jnp.transpose(x4t))
    np.testing.assert_allclose(np.asarray(jnp.transpose(out4_t[perm])),
                               np.asarray(ref4), rtol=1e-5, atol=1e-5)

    print("KERNEL_OK")
</pallas_src>

<mosaic_0001>
module attributes {stable_mosaic.version = 11 : i64} {
  func.func @_pos_embed_kernel(%arg0: i32, %arg1: memref<30x1xf32, #tpu.memory_space<vmem>>, %arg2: memref<3x128xf32, #tpu.memory_space<vmem>>, %arg3: memref<63x128xf32, #tpu.memory_space<vmem>>) attributes {dimension_semantics = [#tpu.dimension_semantics<parallel>], iteration_bounds = array<i64: 1>, scalar_prefetch = 0 : i64, scratch_operands = 0 : i64, tpu.core_type = #tpu.core_type<tc>, window_params = [{pipeline_mode = #tpu.pipeline_mode<synchronous>, transform_indices = @transform_0, window_bounds = array<i64: 30, 1>}, {transform_indices = @transform_1, window_bounds = array<i64: 3, 128>}, {transform_indices = @transform_2, window_bounds = array<i64: 63, 128>}]} {
    %c0 = arith.constant 0 : index
    %c0_0 = arith.constant 0 : index
    %0 = vector.load %arg1[%c0, %c0_0] : memref<30x1xf32, #tpu.memory_space<vmem>>, vector<30x1xf32>
    %1 = vector.shape_cast %0 : vector<30x1xf32> to vector<30x1xf32>
    %2 = vector.broadcast %1 : vector<30x1xf32> to vector<30x128xf32>
    %c0_i32 = arith.constant 0 : i32
    %c128_i32 = arith.constant 128 : i32
    %3 = arith.muli %c0_i32, %c128_i32 : i32
    %4 = tpu.assume_multiple %3, 128 : i32
    %c0_1 = arith.constant 0 : index
    %5 = arith.index_cast %4 : i32 to index
    %6 = vector.load %arg2[%c0_1, %5] : memref<3x128xf32, #tpu.memory_space<vmem>>, vector<3x128xf32>
    %c0_2 = arith.constant 0 : index
    %7 = arith.index_cast %4 : i32 to index
    %8 = vector.load %arg3[%c0_2, %7] : memref<63x128xf32, #tpu.memory_space<vmem>>, vector<3x128xf32>
    tpu.vector_store %arg3[%c0_2, %7], %6 {strides = array<i32>} : memref<63x128xf32, #tpu.memory_space<vmem>>, vector<3x128xf32>,
    %9 = tpu.concatenate %6, %6, %6, %6, %6, %6, %6, %6, %6, %6 in 0 : vector<3x128xf32>, vector<3x128xf32>, vector<3x128xf32>, vector<3x128xf32>, vector<3x128xf32>, vector<3x128xf32>, vector<3x128xf32>, vector<3x128xf32>, vector<3x128xf32>, vector<3x128xf32> -> vector<30x128xf32>
    %10 = arith.mulf %9, %2 : vector<30x128xf32>
    %11 = math.sin %10 : vector<30x128xf32>
    %c3 = arith.constant 3 : index
    %12 = arith.index_cast %4 : i32 to index
    %13 = vector.load %arg3[%c3, %12] : memref<63x128xf32, #tpu.memory_space<vmem>>, vector<30x128xf32>
    tpu.vector_store %arg3[%c3, %12], %11 {strides = array<i32>} : memref<63x128xf32, #tpu.memory_space<vmem>>, vector<30x128xf32>,
    %14 = math.cos %10 : vector<30x128xf32>
    %c33 = arith.constant 33 : index
    %15 = arith.index_cast %4 : i32 to index
    %16 = vector.load %arg3[%c33, %15] : memref<63x128xf32, #tpu.memory_space<vmem>>, vector<30x128xf32>
    tpu.vector_store %arg3[%c33, %15], %14 {strides = array<i32>} : memref<63x128xf32, #tpu.memory_space<vmem>>, vector<30x128xf32>,
    %c1_i32 = arith.constant 1 : i32
    return
  }
  func.func @transform_0(%arg0: i32) -> (i32, i32) {
    %c0_i32 = arith.constant 0 : i32
    %c0_i32_0 = arith.constant 0 : i32
    %c0_i32_1 = arith.constant 0 : i32
    return %c0_i32, %c0_i32_0 : i32, i32
  }
  func.func @transform_1(%arg0: i32) -> (i32, i32) {
    %c0_i32 = arith.constant 0 : i32
    %c0_i32_0 = arith.constant 0 : i32
    return %c0_i32, %arg0 : i32, i32
  }
  func.func @transform_2(%arg0: i32) -> (i32, i32) {
    %c0_i32 = arith.constant 0 : i32
    %c0_i32_0 = arith.constant 0 : i32
    return %c0_i32, %arg0 : i32, i32
  }
}

</mosaic_0001>

<llo_original>
// kernel: tpu_custom_call.1
$region0: #{tpu_custom_call.1}
  #allocation0 [shape = 'u32[]', space=smem, size = 0x4, offset = 0x4, fixed_abs, tag = 'smem constant byte address 0x4 - core index']
  #allocation1 [shape = 'u32[144,128]{1,0:T(1,128)}', space=vmem, size = 0x12000, scoped, tag = 'internal scratch']
  %s0 = inlined_call_operand.vmem [shape: f32[30,1], index: 0, kind: input, shape index: {}]
  %s1 = inlined_call_operand.vmem [shape: f32[3,128], index: 1, kind: input, shape index: {}]
  %s2 = inlined_call_operand.hbm [shape: f32[63,128], index: 2, kind: output, shape index: {}]
  %s3 = sld [smem:[#allocation0]]
  $region18: #{tpu_custom_call.1} parent=0
    _
  %s5 = ssub.s32 1, %s3
  %s6 = scalar_select 0, %s5, %s3
  $region1: #{tpu_custom_call.1} parent=0
    #allocation2 [shape = 'u8[32768]{0}', space=vmem, size = 0x8000, scoped, tag = 'output window, operand 0, single buffered']
    #allocation3 [shape = 's32[1]{0}', space=sflag, size = 0x4, scoped, tag = 'scoped memory for tpu_custom_call.1']
    %7 = vsyncpa [#allocation3], 0
    // Predicated region
    $region2: #{tpu_custom_call.1} parent=1 // pred_check
      _
    $region3: #{tpu_custom_call.1} parent=1 // pred_check_branch
      %9 = sbr.rel (0) target = $region5
    $region4: #{tpu_custom_call.1} parent=1 // pred_region
      _
    $region5: #{tpu_custom_call.1} parent=1 // pred_fallthru
      _
    // Predicated region
    $region6: #{tpu_custom_call.1} parent=1 // pred_check
      _
    $region7: #{tpu_custom_call.1} parent=1 // pred_check_branch
      %11 = sbr.rel (0) target = $region9
    $region8: #{tpu_custom_call.1} parent=1 // pred_region
      _
    $region9: #{tpu_custom_call.1} parent=1 // pred_fallthru
      _
    %v12 = vld [vmem:[%s0] sm:$0xff]
    %v13 = vld [vmem:[%s0 + $0x8] sm:$0xff]
    %v14 = vld [vmem:[%s0 + $0x10] sm:$0xff]
    %v15 = vld [vmem:[%s0 + $0x18] sm:$0x3f]
    %17 = vset.pattern.permute.xlu0 0
    %18 = vperm.xlu0 %17, %v12
    %v19 = vpop.permute.xlu0 %18
    %22 = vset.pattern.permute.xlu0 0
    %23 = vperm.xlu0 %22, %v13
    %v24 = vpop.permute.xlu0 %23
    %27 = vset.pattern.permute.xlu0 0
    %28 = vperm.xlu0 %27, %v14
    %v29 = vpop.permute.xlu0 %28
    %32 = vset.pattern.permute.xlu0 0
    %33 = vperm.xlu0 %32, %v15
    %v34 = vpop.permute.xlu0 %33
    %v36 = vld [vmem:[%s1] sm:$0x7]
    %37 = vst [vmem:[#allocation2] sm:$0x7] %v36
    %v39 = vrot.slane %v36, 5
    %v41 = vrot.slane %v36, 2
    %v43 = vrot.slane %v36, 7
    %v45 = vrot.slane %v36, 4
    %v47 = vrot.slane %v36, 1
    %v49 = vrot.slane %v36, 6
    %v51 = vrot.slane %v36, 3
    %vm53 = vcmask 1042432
    %v54 = vsel %vm53, %v36, %v39
    %vm55 = vcmask 1045504
    %v56 = vsel %vm55, %v54, %v41
    %vm57 = vcmask 1040384
    %v58 = vsel %vm57, %v41, %v43
    %vm59 = vcmask 1043456
    %v60 = vsel %vm59, %v58, %v45
    %vm61 = vcmask 1046528
    %v62 = vsel %vm61, %v60, %v47
    %vm63 = vcmask 1041408
    %v64 = vsel %vm63, %v47, %v49
    %vm65 = vcmask 1044480
    %v66 = vsel %vm65, %v64, %v51
    %v67 = vmul.f32 %v56, %v19
    %v68 = vmul.f32 %v62, %v24
    %v69 = vmul.f32 %v66, %v29
    %v70 = vmul.f32 %v54, %v34
    %v71 = vand.u32 2147483647, %v67
    %vm72 = vcmp.le.f32.partialorder %v71, 0.7853982
    %vm73 = vcmp.lt.s32.totalorder %v67, 0
    %v74 = vand.u32 %v67, 2139095040
    %v75 = vshrl.u32 %v74, 23
    %v76 = vsub.s32 %v75, 127
    %v77 = vand.u32 2147483647, %v67
    %v78 = vand.u32 %v77, 8388607
    %v79 = vor.u32 %v78, 8388608
    %v80 = vsub.s32 0, %v79
    %v81 = vadd.s32 %v76, 1
    %vm82 = vcmp.gt.s32.totalorder %v81, 0
    %v83 = vsel %vm82, %v81, 0
    %v84 = vshrl.u32 %v83, 5
    %v85 = vand.u32 %v83, 31
    %v86 = vsub.s32 32, %v85
    %v87 = vshrl.u32 683565275, %v86
    %v88 = vshll.u32 683565275, %v85
    %v89 = vshrl.u32 2475754826, %v86
    %v90 = vor.u32 %v88, %v89
    %v91 = vshll.u32 2475754826, %v85
    %v92 = vshrl.u32 2131351028, %v86
    %v93 = vor.u32 %v91, %v92
    %v94 = vshll.u32 2131351028, %v85
    %v95 = vshrl.u32 2102212464, %v86
    %v96 = vor.u32 %v94, %v95
    %v97 = vshll.u32 2102212464, %v85
    %v98 = vshrl.u32 920167782, %v86
    %v99 = vor.u32 %v97, %v98
    %v100 = vshll.u32 920167782, %v85
    %v101 = vshrl.u32 1326507024, %v86
    %v102 = vor.u32 %v100, %v101
    %vm103 = vcmp.lt.s32.totalorder %v84, 1
    %vm104 = vcmp.lt.s32.totalorder %v84, 2
    %vm105 = vcmp.lt.s32.totalorder %v84, 3
    %vm106 = vcmp.lt.s32.totalorder %v84, 4
    %v107 = vsel %vm103, %v87, %v90
    %v108 = vsel %vm106, %v96, 2102212464
    %v109 = vsel %vm105, %v93, %v108
    %v110 = vsel %vm104, %v107, %v109
    %v111 = vsel %vm103, %v90, %v93
    %v112 = vsel %vm106, %v99, 920167782
    %v113 = vsel %vm105, %v96, %v112
    %v114 = vsel %vm104, %v111, %v113
    %v115 = vsel %vm103, %v93, %v96
    %v116 = vsel %vm106, %v102, 1326507024
    %v117 = vsel %vm105, %v99, %v116
    %v118 = vsel %vm104, %v115, %v117
    %v119 = vshll.u32 %v79, 8
    %v120 = vmul.u32.u64.compose %v119, %v118
    %v121 = vextract.low.u32 %v120
    %v122 = vextract.high.u32 %v120
    %v123 = vmul.u32.u64.compose %v119, %v114
    %v124 = vextract.low.u32 %v123
    %v125 = vextract.high.u32 %v123
    %v126 = vmul.u32 %v119, %v110
    %v127 = vadd.s32 %v122, %v124
    %vm128 = vc.u32 %v122, %v124
    %v129 = vadd.s32 %v125, 1
    %v130 = vsel %vm128, %v129, %v125
    %v131 = vadd.s32 %v126, %v130
    %v132 = vadd.s32 %v131, 536870912
    %v133 = vshrl.u32 %v132, 30
    %v134 = vshll.u32 %v133, 30
    %v135 = vsub.s32 %v131, %v134
    %vm136 = vcmp.lt.s32.totalorder %v135, 0
    %v137 = vsub.s32 0, %v135
    %v138 = vsel %vm136, %v137, %v135
    %v139 = vclz %v138
    %v140 = vsub.s32 %v139, 2
    %vm141 = vcmp.gt.s32.totalorder 0, %v140
    %v142 = vsel %vm141, 0, %v140
    %v143 = vsub.s32 32, %v142
    %v144 = vshll.u32 %v135, %v142
    %v145 = vshrl.u32 %v127, %v143
    %v146 = vor.u32 %v144, %v145
    %v147 = vsub.s32 4294967266, %v142
    %v148 = vadd.s32 %v147, 127
    %v149 = vshll.u32 %v148, 23
    %v150 = vor.u32 4788187, %v149
    %v151 = vand.u32 2147483647, %v150
    %v153 = vcvt.s32.f32 %v146
    %v154 = vmul.f32 %v153, %v151
    %v155 = vxor.u32 %v154, 2147483648
    %v156 = vsel %vm73, %v155, %v154
    %v157 = vsub.s32 4, %v133
    %v158 = vsel %vm73, %v157, %v133
    %v159 = vsel %vm72, %v67, %v156
    %v160 = vsel %vm72, 0, %v158
    %v161 = vcosq.f32.pop %v159
    %v162 = vsinq.f32.pop %v159
    %vm163 = vweird.f32 %v67
    %v164 = vadd.s32 %v160, 3
    %v165 = vand.u32 %v164, 3
    %vm166 = vcmp.lt.s32.totalorder %v165, 2
    %vm167 = vcmp.eq.s32.totalorder %v165, 0
    %v168 = vxor.u32 %v162, 2147483648
    %v169 = vsel %vm167, %v161, %v168
    %vm170 = vcmp.eq.s32.totalorder %v165, 2
    %v171 = vxor.u32 %v161, 2147483648
    %v172 = vsel %vm170, %v171, %v162
    %v173 = vsel %vm166, %v169, %v172
    %v174 = vsel %vm163, nan, %v173
    %v175 = vand.u32 2147483647, %v68
    %vm176 = vcmp.le.f32.partialorder %v175, 0.7853982
    %vm177 = vcmp.lt.s32.totalorder %v68, 0
    %v178 = vand.u32 %v68, 2139095040
    %v179 = vshrl.u32 %v178, 23
    %v180 = vsub.s32 %v179, 127
    %v181 = vand.u32 2147483647, %v68
    %v182 = vand.u32 %v181, 8388607
    %v183 = vor.u32 %v182, 8388608
    %v184 = vsub.s32 0, %v183
    %v185 = vadd.s32 %v180, 1
    %vm186 = vcmp.gt.s32.totalorder %v185, 0
    %v187 = vsel %vm186, %v185, 0
    %v188 = vshrl.u32 %v187, 5
    %v189 = vand.u32 %v187, 31
    %v190 = vsub.s32 32, %v189
    %v191 = vshrl.u32 683565275, %v190
    %v192 = vshll.u32 683565275, %v189
    %v193 = vshrl.u32 2475754826, %v190
    %v194 = vor.u32 %v192, %v193
    %v195 = vshll.u32 2475754826, %v189
    %v196 = vshrl.u32 2131351028, %v190
    %v197 = vor.u32 %v195, %v196
    %v198 = vshll.u32 2131351028, %v189
    %v199 = vshrl.u32 2102212464, %v190
    %v200 = vor.u32 %v198, %v199
    %v201 = vshll.u32 2102212464, %v189
    %v202 = vshrl.u32 920167782, %v190
    %v203 = vor.u32 %v201, %v202
    %v204 = vshll.u32 920167782, %v189
    %v205 = vshrl.u32 1326507024, %v190
    %v206 = vor.u32 %v204, %v205
    %vm207 = vcmp.lt.s32.totalorder %v188, 1
    %vm208 = vcmp.lt.s32.totalorder %v188, 2
    %vm209 = vcmp.lt.s32.totalorder %v188, 3
    %vm210 = vcmp.lt.s32.totalorder %v188, 4
    %v211 = vsel %vm207, %v191, %v194
    %v212 = vsel %vm210, %v200, 2102212464
    %v213 = vsel %vm209, %v197, %v212
    %v214 = vsel %vm208, %v211, %v213
    %v215 = vsel %vm207, %v194, %v197
    %v216 = vsel %vm210, %v203, 920167782
    %v217 = vsel %vm209, %v200, %v216
    %v218 = vsel %vm208, %v215, %v217
    %v219 = vsel %vm207, %v197, %v200
    %v220 = vsel %vm210, %v206, 1326507024
    %v221 = vsel %vm209, %v203, %v220
    %v222 = vsel %vm208, %v219, %v221
    %v223 = vshll.u32 %v183, 8
    %v224 = vmul.u32.u64.compose %v223, %v222
    %v225 = vextract.low.u32 %v224
    %v226 = vextract.high.u32 %v224
    %v227 = vmul.u32.u64.compose %v223, %v218
    %v228 = vextract.low.u32 %v227
    %v229 = vextract.high.u32 %v227
    %v230 = vmul.u32 %v223, %v214
    %v231 = vadd.s32 %v226, %v228
    %vm232 = vc.u32 %v226, %v228
    %v233 = vadd.s32 %v229, 1
    %v234 = vsel %vm232, %v233, %v229
    %v235 = vadd.s32 %v230, %v234
    %v236 = vadd.s32 %v235, 536870912
    %v237 = vshrl.u32 %v236, 30
    %v238 = vshll.u32 %v237, 30
    %v239 = vsub.s32 %v235, %v238
    %vm240 = vcmp.lt.s32.totalorder %v239, 0
    %v241 = vsub.s32 0, %v239
    %v242 = vsel %vm240, %v241, %v239
    %v243 = vclz %v242
    %v244 = vsub.s32 %v243, 2
    %vm245 = vcmp.gt.s32.totalorder 0, %v244
    %v246 = vsel %vm245, 0, %v244
    %v247 = vsub.s32 32, %v246
    %v248 = vshll.u32 %v239, %v246
    %v249 = vshrl.u32 %v231, %v247
    %v250 = vor.u32 %v248, %v249
    %v251 = vsub.s32 4294967266, %v246
    %v252 = vadd.s32 %v251, 127
    %v253 = vshll.u32 %v252, 23
    %v254 = vor.u32 4788187, %v253
    %v255 = vand.u32 2147483647, %v254
    %v257 = vcvt.s32.f32 %v250
    %v258 = vmul.f32 %v257, %v255
    %v259 = vxor.u32 %v258, 2147483648
    %v260 = vsel %vm177, %v259, %v258
    %v261 = vsub.s32 4, %v237
    %v262 = vsel %vm177, %v261, %v237
    %v263 = vsel %vm176, %v68, %v260
    %v264 = vsel %vm176, 0, %v262
    %v265 = vcosq.f32.pop %v263
    %v266 = vsinq.f32.pop %v263
    %vm267 = vweird.f32 %v68
    %v268 = vadd.s32 %v264, 3
    %v269 = vand.u32 %v268, 3
    %vm270 = vcmp.lt.s32.totalorder %v269, 2
    %vm271 = vcmp.eq.s32.totalorder %v269, 0
    %v272 = vxor.u32 %v266, 2147483648
    %v273 = vsel %vm271, %v265, %v272
    %vm274 = vcmp.eq.s32.totalorder %v269, 2
    %v275 = vxor.u32 %v265, 2147483648
    %v276 = vsel %vm274, %v275, %v266
    %v277 = vsel %vm270, %v273, %v276
    %v278 = vsel %vm267, nan, %v277
    %v279 = vand.u32 2147483647, %v69
    %vm280 = vcmp.le.f32.partialorder %v279, 0.7853982
    %vm281 = vcmp.lt.s32.totalorder %v69, 0
    %v282 = vand.u32 %v69, 2139095040
    %v283 = vshrl.u32 %v282, 23
    %v284 = vsub.s32 %v283, 127
    %v285 = vand.u32 2147483647, %v69
    %v286 = vand.u32 %v285, 8388607
    %v287 = vor.u32 %v286, 8388608
    %v288 = vsub.s32 0, %v287
    %v289 = vadd.s32 %v284, 1
    %vm290 = vcmp.gt.s32.totalorder %v289, 0
    %v291 = vsel %vm290, %v289, 0
    %v292 = vshrl.u32 %v291, 5
    %v293 = vand.u32 %v291, 31
    %v294 = vsub.s32 32, %v293
    %v295 = vshrl.u32 683565275, %v294
    %v296 = vshll.u32 683565275, %v293
    %v297 = vshrl.u32 2475754826, %v294
    %v298 = vor.u32 %v296, %v297
    %v299 = vshll.u32 2475754826, %v293
    %v300 = vshrl.u32 2131351028, %v294
    %v301 = vor.u32 %v299, %v300
    %v302 = vshll.u32 2131351028, %v293
    %v303 = vshrl.u32 2102212464, %v294
    %v304 = vor.u32 %v302, %v303
    %v305 = vshll.u32 2102212464, %v293
    %v306 = vshrl.u32 920167782, %v294
    %v307 = vor.u32 %v305, %v306
    %v308 = vshll.u32 920167782, %v293
    %v309 = vshrl.u32 1326507024, %v294
    %v310 = vor.u32 %v308, %v309
    %vm311 = vcmp.lt.s32.totalorder %v292, 1
    %vm312 = vcmp.lt.s32.totalorder %v292, 2
    %vm313 = vcmp.lt.s32.totalorder %v292, 3
    %vm314 = vcmp.lt.s32.totalorder %v292, 4
    %v315 = vsel %vm311, %v295, %v298
    %v316 = vsel %vm314, %v304, 2102212464
    %v317 = vsel %vm313, %v301, %v316
    %v318 = vsel %vm312, %v315, %v317
    %v319 = vsel %vm311, %v298, %v301
    %v320 = vsel %vm314, %v307, 920167782
    %v321 = vsel %vm313, %v304, %v320
    %v322 = vsel %vm312, %v319, %v321
    %v323 = vsel %vm311, %v301, %v304
    %v324 = vsel %vm314, %v310, 1326507024
    %v325 = vsel %vm313, %v307, %v324
    %v326 = vsel %vm312, %v323, %v325
    %v327 = vshll.u32 %v287, 8
    %v328 = vmul.u32.u64.compose %v327, %v326
    %v329 = vextract.low.u32 %v328
    %v330 = vextract.high.u32 %v328
    %v331 = vmul.u32.u64.compose %v327, %v322
    %v332 = vextract.low.u32 %v331
    %v333 = vextract.high.u32 %v331
    %v334 = vmul.u32 %v327, %v318
    %v335 = vadd.s32 %v330, %v332
    %vm336 = vc.u32 %v330, %v332
    %v337 = vadd.s32 %v333, 1
    %v338 = vsel %vm336, %v337, %v333
    %v339 = vadd.s32 %v334, %v338
    %v340 = vadd.s32 %v339, 536870912
    %v341 = vshrl.u32 %v340, 30
    %v342 = vshll.u32 %v341, 30
    %v343 = vsub.s32 %v339, %v342
    %vm344 = vcmp.lt.s32.totalorder %v343, 0
    %v345 = vsub.s32 0, %v343
    %v346 = vsel %vm344, %v345, %v343
    %v347 = vclz %v346
    %v348 = vsub.s32 %v347, 2
    %vm349 = vcmp.gt.s32.totalorder 0, %v348
    %v350 = vsel %vm349, 0, %v348
    %v351 = vsub.s32 32, %v350
    %v352 = vshll.u32 %v343, %v350
    %v353 = vshrl.u32 %v335, %v351
    %v354 = vor.u32 %v352, %v353
    %v355 = vsub.s32 4294967266, %v350
    %v356 = vadd.s32 %v355, 127
    %v357 = vshll.u32 %v356, 23
    %v358 = vor.u32 4788187, %v357
    %v359 = vand.u32 2147483647, %v358
    %v361 = vcvt.s32.f32 %v354
    %v362 = vmul.f32 %v361, %v359
    %v363 = vxor.u32 %v362, 2147483648
    %v364 = vsel %vm281, %v363, %v362
    %v365 = vsub.s32 4, %v341
    %v366 = vsel %vm281, %v365, %v341
    %v367 = vsel %vm280, %v69, %v364
    %v368 = vsel %vm280, 0, %v366
    %v369 = vcosq.f32.pop %v367
    %v370 = vsinq.f32.pop %v367
    %vm371 = vweird.f32 %v69
    %v372 = vadd.s32 %v368, 3
    %v373 = vand.u32 %v372, 3
    %vm374 = vcmp.lt.s32.totalorder %v373, 2
    %vm375 = vcmp.eq.s32.totalorder %v373, 0
    %v376 = vxor.u32 %v370, 2147483648
    %v377 = vsel %vm375, %v369, %v376
    %vm378 = vcmp.eq.s32.totalorder %v373, 2
    %v379 = vxor.u32 %v369, 2147483648
    %v380 = vsel %vm378, %v379, %v370
    %v381 = vsel %vm374, %v377, %v380
    %v382 = vsel %vm371, nan, %v381
    %v383 = vand.u32 2147483647, %v70
    %vm384 = vcmp.le.f32.partialorder %v383, 0.7853982
    %vm385 = vcmp.lt.s32.totalorder %v70, 0
    %v386 = vand.u32 %v70, 2139095040
    %v387 = vshrl.u32 %v386, 23
    %v388 = vsub.s32 %v387, 127
    %v389 = vand.u32 2147483647, %v70
    %v390 = vand.u32 %v389, 8388607
    %v391 = vor.u32 %v390, 8388608
    %v392 = vsub.s32 0, %v391
    %v393 = vadd.s32 %v388, 1
    %vm394 = vcmp.gt.s32.totalorder %v393, 0
    %v395 = vsel %vm394, %v393, 0
    %v396 = vshrl.u32 %v395, 5
    %v397 = vand.u32 %v395, 31
    %v398 = vsub.s32 32, %v397
    %v399 = vshrl.u32 683565275, %v398
    %v400 = vshll.u32 683565275, %v397
    %v401 = vshrl.u32 2475754826, %v398
    %v402 = vor.u32 %v400, %v401
    %v403 = vshll.u32 2475754826, %v397
    %v404 = vshrl.u32 2131351028, %v398
    %v405 = vor.u32 %v403, %v404
    %v406 = vshll.u32 2131351028, %v397
    %v407 = vshrl.u32 2102212464, %v398
    %v408 = vor.u32 %v406, %v407
    %v409 = vshll.u32 2102212464, %v397
    %v410 = vshrl.u32 920167782, %v398
    %v411 = vor.u32 %v409, %v410
    %v412 = vshll.u32 920167782, %v397
    %v413 = vshrl.u32 1326507024, %v398
    %v414 = vor.u32 %v412, %v413
    %vm415 = vcmp.lt.s32.totalorder %v396, 1
    %vm416 = vcmp.lt.s32.totalorder %v396, 2
    %vm417 = vcmp.lt.s32.totalorder %v396, 3
    %vm418 = vcmp.lt.s32.totalorder %v396, 4
    %v419 = vsel %vm415, %v399, %v402
    %v420 = vsel %vm418, %v408, 2102212464
    %v421 = vsel %vm417, %v405, %v420
    %v422 = vsel %vm416, %v419, %v421
    %v423 = vsel %vm415, %v402, %v405
    %v424 = vsel %vm418, %v411, 920167782
    %v425 = vsel %vm417, %v408, %v424
    %v426 = vsel %vm416, %v423, %v425
    %v427 = vsel %vm415, %v405, %v408
    %v428 = vsel %vm418, %v414, 1326507024
    %v429 = vsel %vm417, %v411, %v428
    %v430 = vsel %vm416, %v427, %v429
    %v431 = vshll.u32 %v391, 8
    %v432 = vmul.u32.u64.compose %v431, %v430
    %v433 = vextract.low.u32 %v432
    %v434 = vextract.high.u32 %v432
    %v435 = vmul.u32.u64.compose %v431, %v426
    %v436 = vextract.low.u32 %v435
    %v437 = vextract.high.u32 %v435
    %v438 = vmul.u32 %v431, %v422
    %v439 = vadd.s32 %v434, %v436
    %vm440 = vc.u32 %v434, %v436
    %v441 = vadd.s32 %v437, 1
    %v442 = vsel %vm440, %v441, %v437
    %v443 = vadd.s32 %v438, %v442
    %v444 = vadd.s32 %v443, 536870912
    %v445 = vshrl.u32 %v444, 30
    %v446 = vshll.u32 %v445, 30
    %v447 = vsub.s32 %v443, %v446
    %vm448 = vcmp.lt.s32.totalorder %v447, 0
    %v449 = vsub.s32 0, %v447
    %v450 = vsel %vm448, %v449, %v447
    %v451 = vclz %v450
    %v452 = vsub.s32 %v451, 2
    %vm453 = vcmp.gt.s32.totalorder 0, %v452
    %v454 = vsel %vm453, 0, %v452
    %v455 = vsub.s32 32, %v454
    %v456 = vshll.u32 %v447, %v454
    %v457 = vshrl.u32 %v439, %v455
    %v458 = vor.u32 %v456, %v457
    %v459 = vsub.s32 4294967266, %v454
    %v460 = vadd.s32 %v459, 127
    %v461 = vshll.u32 %v460, 23
    %v462 = vor.u32 4788187, %v461
    %v463 = vand.u32 2147483647, %v462
    %v465 = vcvt.s32.f32 %v458
    %v466 = vmul.f32 %v465, %v463
    %v467 = vxor.u32 %v466, 2147483648
    %v468 = vsel %vm385, %v467, %v466
    %v469 = vsub.s32 4, %v445
    %v470 = vsel %vm385, %v469, %v445
    %v471 = vsel %vm384, %v70, %v468
    %v472 = vsel %vm384, 0, %v470
    %v473 = vcosq.f32.pop %v471
    %v474 = vsinq.f32.pop %v471
    %vm475 = vweird.f32 %v70
    %v476 = vadd.s32 %v472, 3
    %v477 = vand.u32 %v476, 3
    %vm478 = vcmp.lt.s32.totalorder %v477, 2
    %vm479 = vcmp.eq.s32.totalorder %v477, 0
    %v480 = vxor.u32 %v474, 2147483648
    %v481 = vsel %vm479, %v473, %v480
    %vm482 = vcmp.eq.s32.totalorder %v477, 2
    %v483 = vxor.u32 %v473, 2147483648
    %v484 = vsel %vm482, %v483, %v474
    %v485 = vsel %vm478, %v481, %v484
    %v486 = vsel %vm475, nan, %v485
    %487 = vst [vmem:[#allocation2 + $0x3] sm:$0xff] %v174
    %488 = vst [vmem:[#allocation2 + $0xb] sm:$0xff] %v278
    %489 = vst [vmem:[#allocation2 + $0x13] sm:$0xff] %v382
    %490 = vst [vmem:[#allocation2 + $0x1b] sm:$0x3f] %v486
    %v491 = vand.u32 2147483647, %v67
    %vm492 = vcmp.le.f32.partialorder %v491, 0.7853982
    %vm493 = vcmp.lt.s32.totalorder %v67, 0
    %v494 = vand.u32 %v67, 2139095040
    %v495 = vshrl.u32 %v494, 23
    %v496 = vsub.s32 %v495, 127
    %v497 = vand.u32 2147483647, %v67
    %v498 = vand.u32 %v497, 8388607
    %v499 = vor.u32 %v498, 8388608
    %v500 = vsub.s32 0, %v499
    %v501 = vadd.s32 %v496, 1
    %vm502 = vcmp.gt.s32.totalorder %v501, 0
    %v503 = vsel %vm502, %v501, 0
    %v504 = vshrl.u32 %v503, 5
    %v505 = vand.u32 %v503, 31
    %v506 = vsub.s32 32, %v505
    %v507 = vshrl.u32 683565275, %v506
    %v508 = vshll.u32 683565275, %v505
    %v509 = vshrl.u32 2475754826, %v506
    %v510 = vor.u32 %v508, %v509
    %v511 = vshll.u32 2475754826, %v505
    %v512 = vshrl.u32 2131351028, %v506
    %v513 = vor.u32 %v511, %v512
    %v514 = vshll.u32 2131351028, %v505
    %v515 = vshrl.u32 2102212464, %v506
    %v516 = vor.u32 %v514, %v515
    %v517 = vshll.u32 2102212464, %v505
    %v518 = vshrl.u32 920167782, %v506
    %v519 = vor.u32 %v517, %v518
    %v520 = vshll.u32 920167782, %v505
    %v521 = vshrl.u32 1326507024, %v506
    %v522 = vor.u32 %v520, %v521
    %vm523 = vcmp.lt.s32.totalorder %v504, 1
    %vm524 = vcmp.lt.s32.totalorder %v504, 2
    %vm525 = vcmp.lt.s32.totalorder %v504, 3
    %vm526 = vcmp.lt.s32.totalorder %v504, 4
    %v527 = vsel %vm523, %v507, %v510
    %v528 = vsel %vm526, %v516, 2102212464
    %v529 = vsel %vm525, %v513, %v528
    %v530 = vsel %vm524, %v527, %v529
    %v531 = vsel %vm523, %v510, %v513
    %v532 = vsel %vm526, %v519, 920167782
    %v533 = vsel %vm525, %v516, %v532
    %v534 = vsel %vm524, %v531, %v533
    %v535 = vsel %vm523, %v513, %v516
    %v536 = vsel %vm526, %v522, 1326507024
    %v537 = vsel %vm525, %v519, %v536
    %v538 = vsel %vm524, %v535, %v537
    %v539 = vshll.u32 %v499, 8
    %v540 = vmul.u32.u64.compose %v539, %v538
    %v541 = vextract.low.u32 %v540
    %v542 = vextract.high.u32 %v540
    %v543 = vmul.u32.u64.compose %v539, %v534
    %v544 = vextract.low.u32 %v543
    %v545 = vextract.high.u32 %v543
    %v546 = vmul.u32 %v539, %v530
    %v547 = vadd.s32 %v542, %v544
    %vm548 = vc.u32 %v542, %v544
    %v549 = vadd.s32 %v545, 1
    %v550 = vsel %vm548, %v549, %v545
    %v551 = vadd.s32 %v546, %v550
    %v552 = vadd.s32 %v551, 536870912
    %v553 = vshrl.u32 %v552, 30
    %v554 = vshll.u32 %v553, 30
    %v555 = vsub.s32 %v551, %v554
    %vm556 = vcmp.lt.s32.totalorder %v555, 0
    %v557 = vsub.s32 0, %v555
    %v558 = vsel %vm556, %v557, %v555
    %v559 = vclz %v558
    %v560 = vsub.s32 %v559, 2
    %vm561 = vcmp.gt.s32.totalorder 0, %v560
    %v562 = vsel %vm561, 0, %v560
    %v563 = vsub.s32 32, %v562
    %v564 = vshll.u32 %v555, %v562
    %v565 = vshrl.u32 %v547, %v563
    %v566 = vor.u32 %v564, %v565
    %v567 = vsub.s32 4294967266, %v562
    %v568 = vadd.s32 %v567, 127
    %v569 = vshll.u32 %v568, 23
    %v570 = vor.u32 4788187, %v569
    %v571 = vand.u32 2147483647, %v570
    %v573 = vcvt.s32.f32 %v566
    %v574 = vmul.f32 %v573, %v571
    %v575 = vxor.u32 %v574, 2147483648
    %v576 = vsel %vm493, %v575, %v574
    %v577 = vsub.s32 4, %v553
    %v578 = vsel %vm493, %v577, %v553
    %v579 = vsel %vm492, %v67, %v576
    %v580 = vsel %vm492, 0, %v578
    %v581 = vcosq.f32.pop %v579
    %v582 = vsinq.f32.pop %v579
    %vm583 = vweird.f32 %v67
    %v584 = vand.u32 %v580, 3
    %vm585 = vcmp.lt.s32.totalorder %v584, 2
    %vm586 = vcmp.eq.s32.totalorder %v584, 0
    %v587 = vxor.u32 %v582, 2147483648
    %v588 = vsel %vm586, %v581, %v587
    %vm589 = vcmp.eq.s32.totalorder %v584, 2
    %v590 = vxor.u32 %v581, 2147483648
    %v591 = vsel %vm589, %v590, %v582
    %v592 = vsel %vm585, %v588, %v591
    %v593 = vsel %vm583, nan, %v592
    %v594 = vand.u32 2147483647, %v68
    %vm595 = vcmp.le.f32.partialorder %v594, 0.7853982
    %vm596 = vcmp.lt.s32.totalorder %v68, 0
    %v597 = vand.u32 %v68, 2139095040
    %v598 = vshrl.u32 %v597, 23
    %v599 = vsub.s32 %v598, 127
    %v600 = vand.u32 2147483647, %v68
    %v601 = vand.u32 %v600, 8388607
    %v602 = vor.u32 %v601, 8388608
    %v603 = vsub.s32 0, %v602
    %v604 = vadd.s32 %v599, 1
    %vm605 = vcmp.gt.s32.totalorder %v604, 0
    %v606 = vsel %vm605, %v604, 0
    %v607 = vshrl.u32 %v606, 5
    %v608 = vand.u32 %v606, 31
    %v609 = vsub.s32 32, %v608
    %v610 = vshrl.u32 683565275, %v609
    %v611 = vshll.u32 683565275, %v608
    %v612 = vshrl.u32 2475754826, %v609
    %v613 = vor.u32 %v611, %v612
    %v614 = vshll.u32 2475754826, %v608
    %v615 = vshrl.u32 2131351028, %v609
    %v616 = vor.u32 %v614, %v615
    %v617 = vshll.u32 2131351028, %v608
    %v618 = vshrl.u32 2102212464, %v609
    %v619 = vor.u32 %v617, %v618
    %v620 = vshll.u32 2102212464, %v608
    %v621 = vshrl.u32 920167782, %v609
    %v622 = vor.u32 %v620, %v621
    %v623 = vshll.u32 920167782, %v608
    %v624 = vshrl.u32 1326507024, %v609
    %v625 = vor.u32 %v623, %v624
    %vm626 = vcmp.lt.s32.totalorder %v607, 1
    %vm627 = vcmp.lt.s32.totalorder %v607, 2
    %vm628 = vcmp.lt.s32.totalorder %v607, 3
    %vm629 = vcmp.lt.s32.totalorder %v607, 4
    %v630 = vsel %vm626, %v610, %v613
    %v631 = vsel %vm629, %v619, 2102212464
    %v632 = vsel %vm628, %v616, %v631
    %v633 = vsel %vm627, %v630, %v632
    %v634 = vsel %vm626, %v613, %v616
    %v635 = vsel %vm629, %v622, 920167782
    %v636 = vsel %vm628, %v619, %v635
    %v637 = vsel %vm627, %v634, %v636
    %v638 = vsel %vm626, %v616, %v619
    %v639 = vsel %vm629, %v625, 1326507024
    %v640 = vsel %vm628, %v622, %v639
    %v641 = vsel %vm627, %v638, %v640
    %v642 = vshll.u32 %v602, 8
    %v643 = vmul.u32.u64.compose %v642, %v641
    %v644 = vextract.low.u32 %v643
    %v645 = vextract.high.u32 %v643
    %v646 = vmul.u32.u64.compose %v642, %v637
    %v647 = vextract.low.u32 %v646
    %v648 = vextract.high.u32 %v646
    %v649 = vmul.u32 %v642, %v633
    %v650 = vadd.s32 %v645, %v647
    %vm651 = vc.u32 %v645, %v647
    %v652 = vadd.s32 %v648, 1
    %v653 = vsel %vm651, %v652, %v648
    %v654 = vadd.s32 %v649, %v653
    %v655 = vadd.s32 %v654, 536870912
    %v656 = vshrl.u32 %v655, 30
    %v657 = vshll.u32 %v656, 30
    %v658 = vsub.s32 %v654, %v657
    %vm659 = vcmp.lt.s32.totalorder %v658, 0
    %v660 = vsub.s32 0, %v658
    %v661 = vsel %vm659, %v660, %v658
    %v662 = vclz %v661
    %v663 = vsub.s32 %v662, 2
    %vm664 = vcmp.gt.s32.totalorder 0, %v663
    %v665 = vsel %vm664, 0, %v663
    %v666 = vsub.s32 32, %v665
    %v667 = vshll.u32 %v658, %v665
    %v668 = vshrl.u32 %v650, %v666
    %v669 = vor.u32 %v667, %v668
    %v670 = vsub.s32 4294967266, %v665
    %v671 = vadd.s32 %v670, 127
    %v672 = vshll.u32 %v671, 23
    %v673 = vor.u32 4788187, %v672
    %v674 = vand.u32 2147483647, %v673
    %v676 = vcvt.s32.f32 %v669
    %v677 = vmul.f32 %v676, %v674
    %v678 = vxor.u32 %v677, 2147483648
    %v679 = vsel %vm596, %v678, %v677
    %v680 = vsub.s32 4, %v656
    %v681 = vsel %vm596, %v680, %v656
    %v682 = vsel %vm595, %v68, %v679
    %v683 = vsel %vm595, 0, %v681
    %v684 = vcosq.f32.pop %v682
    %v685 = vsinq.f32.pop %v682
    %vm686 = vweird.f32 %v68
    %v687 = vand.u32 %v683, 3
    %vm688 = vcmp.lt.s32.totalorder %v687, 2
    %vm689 = vcmp.eq.s32.totalorder %v687, 0
    %v690 = vxor.u32 %v685, 2147483648
    %v691 = vsel %vm689, %v684, %v690
    %vm692 = vcmp.eq.s32.totalorder %v687, 2
    %v693 = vxor.u32 %v684, 2147483648
    %v694 = vsel %vm692, %v693, %v685
    %v695 = vsel %vm688, %v691, %v694
    %v696 = vsel %vm686, nan, %v695
    %v697 = vand.u32 2147483647, %v69
    %vm698 = vcmp.le.f32.partialorder %v697, 0.7853982
    %vm699 = vcmp.lt.s32.totalorder %v69, 0
    %v700 = vand.u32 %v69, 2139095040
    %v701 = vshrl.u32 %v700, 23
    %v702 = vsub.s32 %v701, 127
    %v703 = vand.u32 2147483647, %v69
    %v704 = vand.u32 %v703, 8388607
    %v705 = vor.u32 %v704, 8388608
    %v706 = vsub.s32 0, %v705
    %v707 = vadd.s32 %v702, 1
    %vm708 = vcmp.gt.s32.totalorder %v707, 0
    %v709 = vsel %vm708, %v707, 0
    %v710 = vshrl.u32 %v709, 5
    %v711 = vand.u32 %v709, 31
    %v712 = vsub.s32 32, %v711
    %v713 = vshrl.u32 683565275, %v712
    %v714 = vshll.u32 683565275, %v711
    %v715 = vshrl.u32 2475754826, %v712
    %v716 = vor.u32 %v714, %v715
    %v717 = vshll.u32 2475754826, %v711
    %v718 = vshrl.u32 2131351028, %v712
    %v719 = vor.u32 %v717, %v718
    %v720 = vshll.u32 2131351028, %v711
    %v721 = vshrl.u32 2102212464, %v712
    %v722 = vor.u32 %v720, %v721
    %v723 = vshll.u32 2102212464, %v711
    %v724 = vshrl.u32 920167782, %v712
    %v725 = vor.u32 %v723, %v724
    %v726 = vshll.u32 920167782, %v711
    %v727 = vshrl.u32 1326507024, %v712
    %v728 = vor.u32 %v726, %v727
    %vm729 = vcmp.lt.s32.totalorder %v710, 1
    %vm730 = vcmp.lt.s32.totalorder %v710, 2
    %vm731 = vcmp.lt.s32.totalorder %v710, 3
    %vm732 = vcmp.lt.s32.totalorder %v710, 4
    %v733 = vsel %vm729, %v713, %v716
    %v734 = vsel %vm732, %v722, 2102212464
    %v735 = vsel %vm731, %v719, %v734
    %v736 = vsel %vm730, %v733, %v735
    %v737 = vsel %vm729, %v716, %v719
    %v738 = vsel %vm732, %v725, 920167782
    %v739 = vsel %vm731, %v722, %v738
    %v740 = vsel %vm730, %v737, %v739
    %v741 = vsel %vm729, %v719, %v722
    %v742 = vsel %vm732, %v728, 1326507024
    %v743 = vsel %vm731, %v725, %v742
    %v744 = vsel %vm730, %v741, %v743
    %v745 = vshll.u32 %v705, 8
    %v746 = vmul.u32.u64.compose %v745, %v744
    %v747 = vextract.low.u32 %v746
    %v748 = vextract.high.u32 %v746
    %v749 = vmul.u32.u64.compose %v745, %v740
    %v750 = vextract.low.u32 %v749
    %v751 = vextract.high.u32 %v749
    %v752 = vmul.u32 %v745, %v736
    %v753 = vadd.s32 %v748, %v750
    %vm754 = vc.u32 %v748, %v750
    %v755 = vadd.s32 %v751, 1
    %v756 = vsel %vm754, %v755, %v751
    %v757 = vadd.s32 %v752, %v756
    %v758 = vadd.s32 %v757, 536870912
    %v759 = vshrl.u32 %v758, 30
    %v760 = vshll.u32 %v759, 30
    %v761 = vsub.s32 %v757, %v760
    %vm762 = vcmp.lt.s32.totalorder %v761, 0
    %v763 = vsub.s32 0, %v761
    %v764 = vsel %vm762, %v763, %v761
    %v765 = vclz %v764
    %v766 = vsub.s32 %v765, 2
    %vm767 = vcmp.gt.s32.totalorder 0, %v766
    %v768 = vsel %vm767, 0, %v766
    %v769 = vsub.s32 32, %v768
    %v770 = vshll.u32 %v761, %v768
    %v771 = vshrl.u32 %v753, %v769
    %v772 = vor.u32 %v770, %v771
    %v773 = vsub.s32 4294967266, %v768
    %v774 = vadd.s32 %v773, 127
    %v775 = vshll.u32 %v774, 23
    %v776 = vor.u32 4788187, %v775
    %v777 = vand.u32 2147483647, %v776
    %v779 = vcvt.s32.f32 %v772
    %v780 = vmul.f32 %v779, %v777
    %v781 = vxor.u32 %v780, 2147483648
    %v782 = vsel %vm699, %v781, %v780
    %v783 = vsub.s32 4, %v759
    %v784 = vsel %vm699, %v783, %v759
    %v785 = vsel %vm698, %v69, %v782
    %v786 = vsel %vm698, 0, %v784
    %v787 = vcosq.f32.pop %v785
    %v788 = vsinq.f32.pop %v785
    %vm789 = vweird.f32 %v69
    %v790 = vand.u32 %v786, 3
    %vm791 = vcmp.lt.s32.totalorder %v790, 2
    %vm792 = vcmp.eq.s32.totalorder %v790, 0
    %v793 = vxor.u32 %v788, 2147483648
    %v794 = vsel %vm792, %v787, %v793
    %vm795 = vcmp.eq.s32.totalorder %v790, 2
    %v796 = vxor.u32 %v787, 2147483648
    %v797 = vsel %vm795, %v796, %v788
    %v798 = vsel %vm791, %v794, %v797
    %v799 = vsel %vm789, nan, %v798
    %v800 = vand.u32 2147483647, %v70
    %vm801 = vcmp.le.f32.partialorder %v800, 0.7853982
    %vm802 = vcmp.lt.s32.totalorder %v70, 0
    %v803 = vand.u32 %v70, 2139095040
    %v804 = vshrl.u32 %v803, 23
    %v805 = vsub.s32 %v804, 127
    %v806 = vand.u32 2147483647, %v70
    %v807 = vand.u32 %v806, 8388607
    %v808 = vor.u32 %v807, 8388608
    %v809 = vsub.s32 0, %v808
    %v810 = vadd.s32 %v805, 1
    %vm811 = vcmp.gt.s32.totalorder %v810, 0
    %v812 = vsel %vm811, %v810, 0
    %v813 = vshrl.u32 %v812, 5
    %v814 = vand.u32 %v812, 31
    %v815 = vsub.s32 32, %v814
    %v816 = vshrl.u32 683565275, %v815
    %v817 = vshll.u32 683565275, %v814
    %v818 = vshrl.u32 2475754826, %v815
    %v819 = vor.u32 %v817, %v818
    %v820 = vshll.u32 2475754826, %v814
    %v821 = vshrl.u32 2131351028, %v815
    %v822 = vor.u32 %v820, %v821
    %v823 = vshll.u32 2131351028, %v814
    %v824 = vshrl.u32 2102212464, %v815
    %v825 = vor.u32 %v823, %v824
    %v826 = vshll.u32 2102212464, %v814
    %v827 = vshrl.u32 920167782, %v815
    %v828 = vor.u32 %v826, %v827
    %v829 = vshll.u32 920167782, %v814
    %v830 = vshrl.u32 1326507024, %v815
    %v831 = vor.u32 %v829, %v830
    %vm832 = vcmp.lt.s32.totalorder %v813, 1
    %vm833 = vcmp.lt.s32.totalorder %v813, 2
    %vm834 = vcmp.lt.s32.totalorder %v813, 3
    %vm835 = vcmp.lt.s32.totalorder %v813, 4
    %v836 = vsel %vm832, %v816, %v819
    %v837 = vsel %vm835, %v825, 2102212464
    %v838 = vsel %vm834, %v822, %v837
    %v839 = vsel %vm833, %v836, %v838
    %v840 = vsel %vm832, %v819, %v822
    %v841 = vsel %vm835, %v828, 920167782
    %v842 = vsel %vm834, %v825, %v841
    %v843 = vsel %vm833, %v840, %v842
    %v844 = vsel %vm832, %v822, %v825
    %v845 = vsel %vm835, %v831, 1326507024
    %v846 = vsel %vm834, %v828, %v845
    %v847 = vsel %vm833, %v844, %v846
    %v848 = vshll.u32 %v808, 8
    %v849 = vmul.u32.u64.compose %v848, %v847
    %v850 = vextract.low.u32 %v849
    %v851 = vextract.high.u32 %v849
    %v852 = vmul.u32.u64.compose %v848, %v843
    %v853 = vextract.low.u32 %v852
    %v854 = vextract.high.u32 %v852
    %v855 = vmul.u32 %v848, %v839
    %v856 = vadd.s32 %v851, %v853
    %vm857 = vc.u32 %v851, %v853
    %v858 = vadd.s32 %v854, 1
    %v859 = vsel %vm857, %v858, %v854
    %v860 = vadd.s32 %v855, %v859
    %v861 = vadd.s32 %v860, 536870912
    %v862 = vshrl.u32 %v861, 30
    %v863 = vshll.u32 %v862, 30
    %v864 = vsub.s32 %v860, %v863
    %vm865 = vcmp.lt.s32.totalorder %v864, 0
    %v866 = vsub.s32 0, %v864
    %v867 = vsel %vm865, %v866, %v864
    %v868 = vclz %v867
    %v869 = vsub.s32 %v868, 2
    %vm870 = vcmp.gt.s32.totalorder 0, %v869
    %v871 = vsel %vm870, 0, %v869
    %v872 = vsub.s32 32, %v871
    %v873 = vshll.u32 %v864, %v871
    %v874 = vshrl.u32 %v856, %v872
    %v875 = vor.u32 %v873, %v874
    %v876 = vsub.s32 4294967266, %v871
    %v877 = vadd.s32 %v876, 127
    %v878 = vshll.u32 %v877, 23
    %v879 = vor.u32 4788187, %v878
    %v880 = vand.u32 2147483647, %v879
    %v882 = vcvt.s32.f32 %v875
    %v883 = vmul.f32 %v882, %v880
    %v884 = vxor.u32 %v883, 2147483648
    %v885 = vsel %vm802, %v884, %v883
    %v886 = vsub.s32 4, %v862
    %v887 = vsel %vm802, %v886, %v862
    %v888 = vsel %vm801, %v70, %v885
    %v889 = vsel %vm801, 0, %v887
    %v890 = vcosq.f32.pop %v888
    %v891 = vsinq.f32.pop %v888
    %vm892 = vweird.f32 %v70
    %v893 = vand.u32 %v889, 3
    %vm894 = vcmp.lt.s32.totalorder %v893, 2
    %vm895 = vcmp.eq.s32.totalorder %v893, 0
    %v896 = vxor.u32 %v891, 2147483648
    %v897 = vsel %vm895, %v890, %v896
    %vm898 = vcmp.eq.s32.totalorder %v893, 2
    %v899 = vxor.u32 %v890, 2147483648
    %v900 = vsel %vm898, %v899, %v891
    %v901 = vsel %vm894, %v897, %v900
    %v902 = vsel %vm892, nan, %v901
    %903 = vst [vmem:[#allocation2 + $0x21] sm:$0xff] %v593
    %904 = vst [vmem:[#allocation2 + $0x29] sm:$0xff] %v696
    %905 = vst [vmem:[#allocation2 + $0x31] sm:$0xff] %v799
    %906 = vst [vmem:[#allocation2 + $0x39] sm:$0x3f] %v902
    // Predicated region
    $region10: #{tpu_custom_call.1} parent=1 // pred_check
      _
    $region11: #{tpu_custom_call.1} parent=1 // pred_check_branch
      %908 = sbr.rel (0) target = $region13
    $region12: #{tpu_custom_call.1} parent=1 // pred_region
      %s910 = ssub.s32 1024, 1024
      %911 = vsyncadd [#allocation3], %s910
      %s912 = sshll.u32 [#allocation2], 4
      %s913 = int_to_ptr.vmem [resolvable:$true] %s912
      %918 = dma.vmem_to_hbm [thread:$0]  %s913, 1024, %s2, [#allocation3], 128, 128, 8
    $region13: #{tpu_custom_call.1} parent=1 // pred_fallthru
      _
    // Predicated region
    $region14: #{tpu_custom_call.1} parent=1 // pred_check
      _
    $region15: #{tpu_custom_call.1} parent=1 // pred_check_branch
      %920 = sbr.rel (0) target = $region17
    $region16: #{tpu_custom_call.1} parent=1 // pred_region
      %921 = dma.done [#allocation3], 1024
    $region17: #{tpu_custom_call.1} parent=1 // pred_fallthru
      _
    %922 = vsyncpa [#allocation3], 1

</llo_original>
